<compile_context>
chip_gen: v7x
topology: tpu7x:2x2x1
jax: 0.10.0
libtpu: 0.0.40
codegen_flags: <defaults>
</compile_context>

<pallas_src>
import jax
import jax.numpy as jnp
from jax.experimental import pallas as pl
from jax.experimental.pallas import tpu as pltpu

TIME_STEP = 10
HIDDEN = 32
INPUT_SIZE = 1
BATCH = 2


def rnn_kernel(x_ref, h0_ref, whh_ref, pack_ref, out_ref, hn_ref):
    """Fully unrolled Elman-RNN recurrence with fused output projection.

    x_ref   : (B, T)  input, size-1 feature dim squeezed        (VMEM)
    h0_ref  : (B, H)  initial hidden state                      (VMEM, aliased to hn)
    whh_ref : (H, H)  W_hh^T                                    (VMEM)
    pack_ref: (4, H)  rows = [W_ih^T, b_ih+b_hh, W_out, b_out]  (VMEM)
    out_ref : (B, T)  per-step Linear(32, 1) outputs            (VMEM)
    hn_ref  : (B, H)  final hidden state                        (VMEM)
    """
    B, T = x_ref.shape

    wih = pack_ref[0:1, :]        # (1, H)  W_ih^T          (static slices: free)
    bias = pack_ref[1:2, :]       # (1, H)  b_ih + b_hh
    wout = pack_ref[2:3, :]       # (1, H)  W_out
    bout = pack_ref[3:4, 0:1]     # (1, 1)  b_out

    x = x_ref[...]                # (B, T)
    whh = whh_ref[...]            # (H, H) stays resident across the unrolled loop

    # Hoisted input projection, kept entirely in vregs (VPU only, independent
    # of the recurrence so the scheduler overlaps it with the MXU chain).
    u = [x[:, t:t + 1] * wih + bias for t in range(T)]        # T x (B, H)

    # Serial recurrence: one (B,H)@(H,H) f32 MXU matmul + tanh per step; the
    # output projection (VPU mul + XLU lane reduce) hides under that latency.
    h = h0_ref[...]
    outs = []
    for t in range(T):                                        # static unroll, T=10
        pre = u[t] + jnp.dot(h, whh, preferred_element_type=jnp.float32)
        h = jnp.tanh(pre)
        outs.append(jnp.sum(h * wout, axis=-1, keepdims=True))  # (B, 1)

    hn_ref[...] = h
    # Single lane-dense (B, T) store — no per-step masked (B, 1) stores.
    out_ref[...] = jnp.concatenate(outs, axis=-1) + bout


def _build_rnn_call(B, T):
    return pl.pallas_call(
        rnn_kernel,
        out_shape=(jax.ShapeDtypeStruct((B, T), jnp.float32),
                   jax.ShapeDtypeStruct((B, HIDDEN), jnp.float32)),
        in_specs=[
            pl.BlockSpec(memory_space=pltpu.MemorySpace.VMEM),   # x (B, T)
            pl.BlockSpec(memory_space=pltpu.MemorySpace.VMEM),   # h0 (B, H)
            pl.BlockSpec(memory_space=pltpu.MemorySpace.VMEM),   # W_hh^T (H, H)
            pl.BlockSpec(memory_space=pltpu.MemorySpace.VMEM),   # packed params (4, H)
        ],
        out_specs=(pl.BlockSpec(memory_space=pltpu.MemorySpace.VMEM),
                   pl.BlockSpec(memory_space=pltpu.MemorySpace.VMEM)),
        input_output_aliases={1: 1},       # h0 -> hn (add donate_argnums in real use)
        cost_estimate=pl.CostEstimate(
            flops=2 * T * B * HIDDEN * HIDDEN + 4 * T * B * HIDDEN,
            transcendentals=T * B * HIDDEN,
            bytes_accessed=4 * (2 * B * T + 2 * B * HIDDEN
                                + HIDDEN * HIDDEN + 4 * HIDDEN)),
    )


def prepare_params(params):
    """One-time conversion of PyTorch-layout params to kernel layout."""
    w_ih, w_hh, b_ih, b_hh, w_out, b_out = params
    pack = jnp.stack(
        [w_ih.reshape(HIDDEN),                              # W_ih^T   (input_size == 1)
         (b_ih + b_hh).reshape(HIDDEN),                     # combined bias
         w_out.reshape(HIDDEN),                             # W_out
         jnp.broadcast_to(b_out.reshape(1), (HIDDEN,))],    # b_out broadcast row
        axis=0).astype(jnp.float32)                         # (4, H)
    return (w_hh.T.astype(jnp.float32), pack)               # W_hh^T, packed small params


def rnn_forward(x, h_state, kparams):
    """Matches RNN.forward(x, h_state) of the PyTorch module.

    x       : (B, T, 1) float32, batch_first (T == TIME_STEP)
    h_state : None or (1, B, 32)
    returns : (outs (B, TIME_STEP, 1), h_state (1, B, 32))
    """
    whh_t, pack = kparams
    B, T, _ = x.shape
    x2d = x.reshape(B, T).astype(jnp.float32)      # squeeze feature dim, NO transpose
    if h_state is None:
        h0 = jnp.zeros((B, HIDDEN), jnp.float32)
    else:
        h0 = h_state[0].astype(jnp.float32)

    out_bt, h_n = _build_rnn_call(B, T)(x2d, h0, whh_t, pack)

    outs = out_bt[:, :, None]                      # (B, T, 1) — pure reshape
    return outs.reshape(-1, TIME_STEP, 1), h_n[None]          # (1, B, H)


def reference_forward(x, h_state, params):
    """Pure-JAX reference identical to PyTorch semantics."""
    w_ih, w_hh, b_ih, b_hh, w_out, b_out = params
    B, T, _ = x.shape
    h = jnp.zeros((B, HIDDEN), jnp.float32) if h_state is None else h_state[0]
    outs = []
    for t in range(T):
        h = jnp.tanh(x[:, t, :] @ w_ih.T + b_ih + h @ w_hh.T + b_hh)
        outs.append(h @ w_out.T + b_out)
    outs = jnp.stack(outs, axis=1)                 # (B, T, 1)
    return outs.reshape(-1, TIME_STEP, 1), h[None]


def init_params(key):
    # PyTorch nn.RNN / nn.Linear default: U(-1/sqrt(H), 1/sqrt(H))
    k_rnn = 1.0 / jnp.sqrt(jnp.float32(HIDDEN))
    keys = jax.random.split(key, 6)
    w_ih = jax.random.uniform(keys[0], (HIDDEN, INPUT_SIZE), jnp.float32, -k_rnn, k_rnn)
    w_hh = jax.random.uniform(keys[1], (HIDDEN, HIDDEN), jnp.float32, -k_rnn, k_rnn)
    b_ih = jax.random.uniform(keys[2], (HIDDEN,), jnp.float32, -k_rnn, k_rnn)
    b_hh = jax.random.uniform(keys[3], (HIDDEN,), jnp.float32, -k_rnn, k_rnn)
    w_out = jax.random.uniform(keys[4], (1, HIDDEN), jnp.float32, -k_rnn, k_rnn)
    b_out = jax.random.uniform(keys[5], (1,), jnp.float32, -k_rnn, k_rnn)
    return (w_ih, w_hh, b_ih, b_hh, w_out, b_out)


if __name__ == "__main__":
    key = jax.random.PRNGKey(0)
    pkey, xkey = jax.random.split(key)
    params = init_params(pkey)
    kparams = prepare_params(params)          # weight transposes / packing done ONCE

    # x: (batch=2, seq=TIME_STEP, input_size=1), h_state=None (first call)
    x = jax.random.normal(xkey, (BATCH, TIME_STEP, INPUT_SIZE), jnp.float32)

    fwd = jax.jit(rnn_forward)                # fuse wrapper-side reshapes

    outs, h_state = fwd(x, None, kparams)
    outs = jax.block_until_ready(outs)
    h_state = jax.block_until_ready(h_state)

    ref_outs, ref_h = reference_forward(x, None, params)
    assert outs.shape == (BATCH, TIME_STEP, 1)
    assert h_state.shape == (1, BATCH, HIDDEN)
    assert jnp.allclose(outs, ref_outs, atol=1e-5, rtol=1e-5)
    assert jnp.allclose(h_state, ref_h, atol=1e-5, rtol=1e-5)

    # second call feeding the returned hidden state back in (stateful usage)
    outs2, h_state2 = fwd(x, h_state, kparams)
    ref_outs2, ref_h2 = reference_forward(x, h_state, params)
    jax.block_until_ready(outs2)
    assert jnp.allclose(outs2, ref_outs2, atol=1e-5, rtol=1e-5)
    assert jnp.allclose(h_state2, ref_h2, atol=1e-5, rtol=1e-5)

    print("KERNEL_OK")
</pallas_src>

<mosaic_0001>
module attributes {stable_mosaic.version = 11 : i64} {
  func.func @rnn_kernel(%arg0: memref<2x10xf32, #tpu.memory_space<vmem>>, %arg1: memref<2x32xf32, #tpu.memory_space<vmem>>, %arg2: memref<32x32xf32, #tpu.memory_space<vmem>>, %arg3: memref<4x32xf32, #tpu.memory_space<vmem>>, %arg4: memref<2x10xf32, #tpu.memory_space<vmem>>, %arg5: memref<2x32xf32, #tpu.memory_space<vmem>>) attributes {dimension_semantics = [], scalar_prefetch = 0 : i64, scratch_operands = 0 : i64, tpu.core_type = #tpu.core_type<tc>} {
    %c0 = arith.constant 0 : index
    %c0_0 = arith.constant 0 : index
    %0 = vector.load %arg3[%c0, %c0_0] : memref<4x32xf32, #tpu.memory_space<vmem>>, vector<1x32xf32>
    %c1 = arith.constant 1 : index
    %c0_1 = arith.constant 0 : index
    %1 = vector.load %arg3[%c1, %c0_1] : memref<4x32xf32, #tpu.memory_space<vmem>>, vector<1x32xf32>
    %c2 = arith.constant 2 : index
    %c0_2 = arith.constant 0 : index
    %2 = vector.load %arg3[%c2, %c0_2] : memref<4x32xf32, #tpu.memory_space<vmem>>, vector<1x32xf32>
    %c3 = arith.constant 3 : index
    %c0_3 = arith.constant 0 : index
    %3 = vector.load %arg3[%c3, %c0_3] : memref<4x32xf32, #tpu.memory_space<vmem>>, vector<1x1xf32>
    %c0_4 = arith.constant 0 : index
    %c0_5 = arith.constant 0 : index
    %4 = vector.load %arg0[%c0_4, %c0_5] : memref<2x10xf32, #tpu.memory_space<vmem>>, vector<2x10xf32>
    %c0_6 = arith.constant 0 : index
    %c0_7 = arith.constant 0 : index
    %5 = vector.load %arg2[%c0_6, %c0_7] : memref<32x32xf32, #tpu.memory_space<vmem>>, vector<32x32xf32>
    %6 = vector.extract_strided_slice %4 {offsets = [0, 0], sizes = [2, 1], strides = [1, 1]} : vector<2x10xf32> to vector<2x1xf32>
    %7 = vector.broadcast %6 : vector<2x1xf32> to vector<2x32xf32>
    %8 = vector.broadcast %0 : vector<1x32xf32> to vector<2x32xf32>
    %9 = arith.mulf %7, %8 : vector<2x32xf32>
    %10 = vector.broadcast %1 : vector<1x32xf32> to vector<2x32xf32>
    %11 = arith.addf %9, %10 : vector<2x32xf32>
    %12 = vector.extract_strided_slice %4 {offsets = [0, 1], sizes = [2, 1], strides = [1, 1]} : vector<2x10xf32> to vector<2x1xf32>
    %13 = vector.broadcast %12 : vector<2x1xf32> to vector<2x32xf32>
    %14 = vector.broadcast %0 : vector<1x32xf32> to vector<2x32xf32>
    %15 = arith.mulf %13, %14 : vector<2x32xf32>
    %16 = vector.broadcast %1 : vector<1x32xf32> to vector<2x32xf32>
    %17 = arith.addf %15, %16 : vector<2x32xf32>
    %18 = vector.extract_strided_slice %4 {offsets = [0, 2], sizes = [2, 1], strides = [1, 1]} : vector<2x10xf32> to vector<2x1xf32>
    %19 = vector.broadcast %18 : vector<2x1xf32> to vector<2x32xf32>
    %20 = vector.broadcast %0 : vector<1x32xf32> to vector<2x32xf32>
    %21 = arith.mulf %19, %20 : vector<2x32xf32>
    %22 = vector.broadcast %1 : vector<1x32xf32> to vector<2x32xf32>
    %23 = arith.addf %21, %22 : vector<2x32xf32>
    %24 = vector.extract_strided_slice %4 {offsets = [0, 3], sizes = [2, 1], strides = [1, 1]} : vector<2x10xf32> to vector<2x1xf32>
    %25 = vector.broadcast %24 : vector<2x1xf32> to vector<2x32xf32>
    %26 = vector.broadcast %0 : vector<1x32xf32> to vector<2x32xf32>
    %27 = arith.mulf %25, %26 : vector<2x32xf32>
    %28 = vector.broadcast %1 : vector<1x32xf32> to vector<2x32xf32>
    %29 = arith.addf %27, %28 : vector<2x32xf32>
    %30 = vector.extract_strided_slice %4 {offsets = [0, 4], sizes = [2, 1], strides = [1, 1]} : vector<2x10xf32> to vector<2x1xf32>
    %31 = vector.broadcast %30 : vector<2x1xf32> to vector<2x32xf32>
    %32 = vector.broadcast %0 : vector<1x32xf32> to vector<2x32xf32>
    %33 = arith.mulf %31, %32 : vector<2x32xf32>
    %34 = vector.broadcast %1 : vector<1x32xf32> to vector<2x32xf32>
    %35 = arith.addf %33, %34 : vector<2x32xf32>
    %36 = vector.extract_strided_slice %4 {offsets = [0, 5], sizes = [2, 1], strides = [1, 1]} : vector<2x10xf32> to vector<2x1xf32>
    %37 = vector.broadcast %36 : vector<2x1xf32> to vector<2x32xf32>
    %38 = vector.broadcast %0 : vector<1x32xf32> to vector<2x32xf32>
    %39 = arith.mulf %37, %38 : vector<2x32xf32>
    %40 = vector.broadcast %1 : vector<1x32xf32> to vector<2x32xf32>
    %41 = arith.addf %39, %40 : vector<2x32xf32>
    %42 = vector.extract_strided_slice %4 {offsets = [0, 6], sizes = [2, 1], strides = [1, 1]} : vector<2x10xf32> to vector<2x1xf32>
    %43 = vector.broadcast %42 : vector<2x1xf32> to vector<2x32xf32>
    %44 = vector.broadcast %0 : vector<1x32xf32> to vector<2x32xf32>
    %45 = arith.mulf %43, %44 : vector<2x32xf32>
    %46 = vector.broadcast %1 : vector<1x32xf32> to vector<2x32xf32>
    %47 = arith.addf %45, %46 : vector<2x32xf32>
    %48 = vector.extract_strided_slice %4 {offsets = [0, 7], sizes = [2, 1], strides = [1, 1]} : vector<2x10xf32> to vector<2x1xf32>
    %49 = vector.broadcast %48 : vector<2x1xf32> to vector<2x32xf32>
    %50 = vector.broadcast %0 : vector<1x32xf32> to vector<2x32xf32>
    %51 = arith.mulf %49, %50 : vector<2x32xf32>
    %52 = vector.broadcast %1 : vector<1x32xf32> to vector<2x32xf32>
    %53 = arith.addf %51, %52 : vector<2x32xf32>
    %54 = vector.extract_strided_slice %4 {offsets = [0, 8], sizes = [2, 1], strides = [1, 1]} : vector<2x10xf32> to vector<2x1xf32>
    %55 = vector.broadcast %54 : vector<2x1xf32> to vector<2x32xf32>
    %56 = vector.broadcast %0 : vector<1x32xf32> to vector<2x32xf32>
    %57 = arith.mulf %55, %56 : vector<2x32xf32>
    %58 = vector.broadcast %1 : vector<1x32xf32> to vector<2x32xf32>
    %59 = arith.addf %57, %58 : vector<2x32xf32>
    %60 = vector.extract_strided_slice %4 {offsets = [0, 9], sizes = [2, 1], strides = [1, 1]} : vector<2x10xf32> to vector<2x1xf32>
    %61 = vector.broadcast %60 : vector<2x1xf32> to vector<2x32xf32>
    %62 = vector.broadcast %0 : vector<1x32xf32> to vector<2x32xf32>
    %63 = arith.mulf %61, %62 : vector<2x32xf32>
    %64 = vector.broadcast %1 : vector<1x32xf32> to vector<2x32xf32>
    %65 = arith.addf %63, %64 : vector<2x32xf32>
    %c0_8 = arith.constant 0 : index
    %c0_9 = arith.constant 0 : index
    %66 = vector.load %arg1[%c0_8, %c0_9] : memref<2x32xf32, #tpu.memory_space<vmem>>, vector<2x32xf32>
    %cst = arith.constant dense<0.000000e+00> : vector<2x32xf32>
    %67 = tpu.matmul %66, %5, %cst {dimension_numbers = #tpu.dot_dimension_numbers<[1], [0], [0], [1], [0, 0, 1, 1], [], []>} : vector<2x32xf32>, vector<32x32xf32>, vector<2x32xf32> -> vector<2x32xf32>
    %68 = arith.addf %11, %67 : vector<2x32xf32>
    %69 = math.tanh %68 : vector<2x32xf32>
    %70 = vector.broadcast %2 : vector<1x32xf32> to vector<2x32xf32>
    %71 = arith.mulf %69, %70 : vector<2x32xf32>
    %cst_10 = arith.constant dense<0.000000e+00> : vector<2xf32>
    %72 = vector.multi_reduction <add>, %71, %cst_10 [1] : vector<2x32xf32> to vector<2xf32>
    %73 = vector.shape_cast %72 : vector<2xf32> to vector<2x1xf32>
    %cst_11 = arith.constant dense<0.000000e+00> : vector<2x32xf32>
    %74 = tpu.matmul %69, %5, %cst_11 {dimension_numbers = #tpu.dot_dimension_numbers<[1], [0], [0], [1], [0, 0, 1, 1], [], []>} : vector<2x32xf32>, vector<32x32xf32>, vector<2x32xf32> -> vector<2x32xf32>
    %75 = arith.addf %17, %74 : vector<2x32xf32>
    %76 = math.tanh %75 : vector<2x32xf32>
    %77 = vector.broadcast %2 : vector<1x32xf32> to vector<2x32xf32>
    %78 = arith.mulf %76, %77 : vector<2x32xf32>
    %cst_12 = arith.constant dense<0.000000e+00> : vector<2xf32>
    %79 = vector.multi_reduction <add>, %78, %cst_12 [1] : vector<2x32xf32> to vector<2xf32>
    %80 = vector.shape_cast %79 : vector<2xf32> to vector<2x1xf32>
    %cst_13 = arith.constant dense<0.000000e+00> : vector<2x32xf32>
    %81 = tpu.matmul %76, %5, %cst_13 {dimension_numbers = #tpu.dot_dimension_numbers<[1], [0], [0], [1], [0, 0, 1, 1], [], []>} : vector<2x32xf32>, vector<32x32xf32>, vector<2x32xf32> -> vector<2x32xf32>
    %82 = arith.addf %23, %81 : vector<2x32xf32>
    %83 = math.tanh %82 : vector<2x32xf32>
    %84 = vector.broadcast %2 : vector<1x32xf32> to vector<2x32xf32>
    %85 = arith.mulf %83, %84 : vector<2x32xf32>
    %cst_14 = arith.constant dense<0.000000e+00> : vector<2xf32>
    %86 = vector.multi_reduction <add>, %85, %cst_14 [1] : vector<2x32xf32> to vector<2xf32>
    %87 = vector.shape_cast %86 : vector<2xf32> to vector<2x1xf32>
    %cst_15 = arith.constant dense<0.000000e+00> : vector<2x32xf32>
    %88 = tpu.matmul %83, %5, %cst_15 {dimension_numbers = #tpu.dot_dimension_numbers<[1], [0], [0], [1], [0, 0, 1, 1], [], []>} : vector<2x32xf32>, vector<32x32xf32>, vector<2x32xf32> -> vector<2x32xf32>
    %89 = arith.addf %29, %88 : vector<2x32xf32>
    %90 = math.tanh %89 : vector<2x32xf32>
    %91 = vector.broadcast %2 : vector<1x32xf32> to vector<2x32xf32>
    %92 = arith.mulf %90, %91 : vector<2x32xf32>
    %cst_16 = arith.constant dense<0.000000e+00> : vector<2xf32>
    %93 = vector.multi_reduction <add>, %92, %cst_16 [1] : vector<2x32xf32> to vector<2xf32>
    %94 = vector.shape_cast %93 : vector<2xf32> to vector<2x1xf32>
    %cst_17 = arith.constant dense<0.000000e+00> : vector<2x32xf32>
    %95 = tpu.matmul %90, %5, %cst_17 {dimension_numbers = #tpu.dot_dimension_numbers<[1], [0], [0], [1], [0, 0, 1, 1], [], []>} : vector<2x32xf32>, vector<32x32xf32>, vector<2x32xf32> -> vector<2x32xf32>
    %96 = arith.addf %35, %95 : vector<2x32xf32>
    %97 = math.tanh %96 : vector<2x32xf32>
    %98 = vector.broadcast %2 : vector<1x32xf32> to vector<2x32xf32>
    %99 = arith.mulf %97, %98 : vector<2x32xf32>
    %cst_18 = arith.constant dense<0.000000e+00> : vector<2xf32>
    %100 = vector.multi_reduction <add>, %99, %cst_18 [1] : vector<2x32xf32> to vector<2xf32>
    %101 = vector.shape_cast %100 : vector<2xf32> to vector<2x1xf32>
    %cst_19 = arith.constant dense<0.000000e+00> : vector<2x32xf32>
    %102 = tpu.matmul %97, %5, %cst_19 {dimension_numbers = #tpu.dot_dimension_numbers<[1], [0], [0], [1], [0, 0, 1, 1], [], []>} : vector<2x32xf32>, vector<32x32xf32>, vector<2x32xf32> -> vector<2x32xf32>
    %103 = arith.addf %41, %102 : vector<2x32xf32>
    %104 = math.tanh %103 : vector<2x32xf32>
    %105 = vector.broadcast %2 : vector<1x32xf32> to vector<2x32xf32>
    %106 = arith.mulf %104, %105 : vector<2x32xf32>
    %cst_20 = arith.constant dense<0.000000e+00> : vector<2xf32>
    %107 = vector.multi_reduction <add>, %106, %cst_20 [1] : vector<2x32xf32> to vector<2xf32>
    %108 = vector.shape_cast %107 : vector<2xf32> to vector<2x1xf32>
    %cst_21 = arith.constant dense<0.000000e+00> : vector<2x32xf32>
    %109 = tpu.matmul %104, %5, %cst_21 {dimension_numbers = #tpu.dot_dimension_numbers<[1], [0], [0], [1], [0, 0, 1, 1], [], []>} : vector<2x32xf32>, vector<32x32xf32>, vector<2x32xf32> -> vector<2x32xf32>
    %110 = arith.addf %47, %109 : vector<2x32xf32>
    %111 = math.tanh %110 : vector<2x32xf32>
    %112 = vector.broadcast %2 : vector<1x32xf32> to vector<2x32xf32>
    %113 = arith.mulf %111, %112 : vector<2x32xf32>
    %cst_22 = arith.constant dense<0.000000e+00> : vector<2xf32>
    %114 = vector.multi_reduction <add>, %113, %cst_22 [1] : vector<2x32xf32> to vector<2xf32>
    %115 = vector.shape_cast %114 : vector<2xf32> to vector<2x1xf32>
    %cst_23 = arith.constant dense<0.000000e+00> : vector<2x32xf32>
    %116 = tpu.matmul %111, %5, %cst_23 {dimension_numbers = #tpu.dot_dimension_numbers<[1], [0], [0], [1], [0, 0, 1, 1], [], []>} : vector<2x32xf32>, vector<32x32xf32>, vector<2x32xf32> -> vector<2x32xf32>
    %117 = arith.addf %53, %116 : vector<2x32xf32>
    %118 = math.tanh %117 : vector<2x32xf32>
    %119 = vector.broadcast %2 : vector<1x32xf32> to vector<2x32xf32>
    %120 = arith.mulf %118, %119 : vector<2x32xf32>
    %cst_24 = arith.constant dense<0.000000e+00> : vector<2xf32>
    %121 = vector.multi_reduction <add>, %120, %cst_24 [1] : vector<2x32xf32> to vector<2xf32>
    %122 = vector.shape_cast %121 : vector<2xf32> to vector<2x1xf32>
    %cst_25 = arith.constant dense<0.000000e+00> : vector<2x32xf32>
    %123 = tpu.matmul %118, %5, %cst_25 {dimension_numbers = #tpu.dot_dimension_numbers<[1], [0], [0], [1], [0, 0, 1, 1], [], []>} : vector<2x32xf32>, vector<32x32xf32>, vector<2x32xf32> -> vector<2x32xf32>
    %124 = arith.addf %59, %123 : vector<2x32xf32>
    %125 = math.tanh %124 : vector<2x32xf32>
    %126 = vector.broadcast %2 : vector<1x32xf32> to vector<2x32xf32>
    %127 = arith.mulf %125, %126 : vector<2x32xf32>
    %cst_26 = arith.constant dense<0.000000e+00> : vector<2xf32>
    %128 = vector.multi_reduction <add>, %127, %cst_26 [1] : vector<2x32xf32> to vector<2xf32>
    %129 = vector.shape_cast %128 : vector<2xf32> to vector<2x1xf32>
    %cst_27 = arith.constant dense<0.000000e+00> : vector<2x32xf32>
    %130 = tpu.matmul %125, %5, %cst_27 {dimension_numbers = #tpu.dot_dimension_numbers<[1], [0], [0], [1], [0, 0, 1, 1], [], []>} : vector<2x32xf32>, vector<32x32xf32>, vector<2x32xf32> -> vector<2x32xf32>
    %131 = arith.addf %65, %130 : vector<2x32xf32>
    %132 = math.tanh %131 : vector<2x32xf32>
    %133 = vector.broadcast %2 : vector<1x32xf32> to vector<2x32xf32>
    %134 = arith.mulf %132, %133 : vector<2x32xf32>
    %cst_28 = arith.constant dense<0.000000e+00> : vector<2xf32>
    %135 = vector.multi_reduction <add>, %134, %cst_28 [1] : vector<2x32xf32> to vector<2xf32>
    %136 = vector.shape_cast %135 : vector<2xf32> to vector<2x1xf32>
    %c0_29 = arith.constant 0 : index
    %c0_30 = arith.constant 0 : index
    %137 = vector.load %arg5[%c0_29, %c0_30] : memref<2x32xf32, #tpu.memory_space<vmem>>, vector<2x32xf32>
    tpu.vector_store %arg5[%c0_29, %c0_30], %132 {strides = array<i32>} : memref<2x32xf32, #tpu.memory_space<vmem>>, vector<2x32xf32>,
    %138 = tpu.concatenate %73, %80, %87, %94, %101, %108, %115, %122, %129, %136 in 1 : vector<2x1xf32>, vector<2x1xf32>, vector<2x1xf32>, vector<2x1xf32>, vector<2x1xf32>, vector<2x1xf32>, vector<2x1xf32>, vector<2x1xf32>, vector<2x1xf32>, vector<2x1xf32> -> vector<2x10xf32>
    %139 = vector.broadcast %3 : vector<1x1xf32> to vector<2x10xf32>
    %140 = arith.addf %138, %139 : vector<2x10xf32>
    %c0_31 = arith.constant 0 : index
    %c0_32 = arith.constant 0 : index
    %141 = vector.load %arg4[%c0_31, %c0_32] : memref<2x10xf32, #tpu.memory_space<vmem>>, vector<2x10xf32>
    tpu.vector_store %arg4[%c0_31, %c0_32], %140 {strides = array<i32>} : memref<2x10xf32, #tpu.memory_space<vmem>>, vector<2x10xf32>,
    return
  }
}

</mosaic_0001>

<llo_original>
// kernel: rnn_forward.1
$region0: #{rnn_forward.1}
  #allocation0 [shape = 'u32[]', space=smem, size = 0x4, offset = 0x4, fixed_abs, tag = 'smem constant byte address 0x4 - core index']
  #allocation1 [shape = 'u32[144,128]{1,0:T(1,128)}', space=vmem, size = 0x12000, scoped, tag = 'internal scratch']
  %s0 = inlined_call_operand.vmem [shape: f32[2,10], index: 0, kind: input, shape index: {}]
  %s1 = inlined_call_operand.vmem [shape: f32[2,32], index: 1, kind: input, shape index: {}, may-alias: {1,5}]
  %s2 = inlined_call_operand.hbm [shape: f32[32,32], index: 2, kind: input, shape index: {}]
  %s3 = inlined_call_operand.vmem [shape: f32[4,32], index: 3, kind: input, shape index: {}]
  %s4 = inlined_call_operand.hbm [shape: f32[2,10], index: 4, kind: output, shape index: {0}]
  %s5 = inlined_call_operand.vmem [shape: f32[2,32], index: 5, kind: output, shape index: {1}, may-alias: {1,5}]
  %6 = xla_tuple %s4, %s5
  %s7 = sld [smem:[#allocation0]]
  $region38: #{rnn_forward.1} parent=0
    _
  %s9 = ssub.s32 1, %s7
  %s10 = scalar_select 0, %s9, %s7
  $region1: #{rnn_forward.1} parent=0
    #allocation2 [shape = 'u8[16384]{0}', space=vmem, size = 0x4000, scoped, tag = 'input window, operand 2, single buffered']
    #allocation3 [shape = 's32[1]{0}', space=sflag, size = 0x4, scoped, tag = 'scoped memory for rnn_forward.1']
    #allocation4 [shape = 's32[1]{0}', space=sflag, size = 0x4, scoped, tag = 'scoped memory for rnn_forward.1']
    #allocation5 [shape = 'u8[1024]{0}', space=vmem, size = 0x400, scoped, tag = 'output window, operand 0, single buffered']
    %11 = vsyncpa [#allocation3], 0
    %12 = vsyncpa [#allocation4], 0
    // Predicated region
    $region2: #{rnn_forward.1} parent=1 // pred_check
      _
    $region3: #{rnn_forward.1} parent=1 // pred_check_branch
      %14 = sbr.rel (0) target = $region5
    $region4: #{rnn_forward.1} parent=1 // pred_region
      _
    $region5: #{rnn_forward.1} parent=1 // pred_fallthru
      _
    // Predicated region
    $region6: #{rnn_forward.1} parent=1 // pred_check
      _
    $region7: #{rnn_forward.1} parent=1 // pred_check_branch
      %16 = sbr.rel (0) target = $region9
    $region8: #{rnn_forward.1} parent=1 // pred_region
      _
    $region9: #{rnn_forward.1} parent=1 // pred_fallthru
      _
    // Predicated region
    $region10: #{rnn_forward.1} parent=1 // pred_check
      _
    $region11: #{rnn_forward.1} parent=1 // pred_check_branch
      %18 = sbr.rel (0) target = $region13
    $region12: #{rnn_forward.1} parent=1 // pred_region
      %s20 = ssub.s32 512, 512
      %21 = vsyncadd [#allocation3], %s20
      %s22 = sshll.u32 [#allocation2], 4
      %s23 = int_to_ptr.vmem [resolvable:$true] %s22
      %28 = dma.hbm_to_vmem [thread:$0]  %s2, 512, %s23, [#allocation3], 128, 128, 8
    $region13: #{rnn_forward.1} parent=1 // pred_fallthru
      _
    // Predicated region
    $region14: #{rnn_forward.1} parent=1 // pred_check
      _
    $region15: #{rnn_forward.1} parent=1 // pred_check_branch
      %30 = sbr.rel (0) target = $region17
    $region16: #{rnn_forward.1} parent=1 // pred_region
      _
    $region17: #{rnn_forward.1} parent=1 // pred_fallthru
      _
    // Predicated region
    $region18: #{rnn_forward.1} parent=1 // pred_check
      _
    $region19: #{rnn_forward.1} parent=1 // pred_check_branch
      %32 = sbr.rel (0) target = $region21
    $region20: #{rnn_forward.1} parent=1 // pred_region
      %33 = dma.done [#allocation3], 512
    $region21: #{rnn_forward.1} parent=1 // pred_fallthru
      _
    %v34 = vld [vmem:[%s3] sm:$0x1]
    %v35 = vld [vmem:[%s3 + $0x1] sm:$0x1]
    %v36 = vld [vmem:[%s3 + $0x2] sm:$0x1]
    %v37 = vld [vmem:[%s3 + $0x3] sm:$0x1]
    %v38 = vld [vmem:[%s0] sm:$0x3]
    %v39 = vld [vmem:[#allocation2] sm:$0xff]
    %v40 = vld [vmem:[#allocation2 + $0x8] sm:$0xff]
    %v41 = vld [vmem:[#allocation2 + $0x10] sm:$0xff]
    %v42 = vld [vmem:[#allocation2 + $0x18] sm:$0xff]
    %44 = vset.pattern.permute.xlu0 0
    %45 = vperm.xlu0 %44, %v38
    %v46 = vpop.permute.xlu0 %45
    %v48 = vlaneseq
    %v49 = vshrl.u32 %v48, 7
    %v50 = vsub.s32 0, %v49
    %v51 = vrot.slane %v34, %v50
    %v52 = vmul.f32 %v46, %v51
    %v53 = vlaneseq
    %v54 = vshrl.u32 %v53, 7
    %v55 = vsub.s32 0, %v54
    %v56 = vrot.slane %v35, %v55
    %v57 = vadd.f32 %v52, %v56
    %58 = vset.pattern.permute.xlu0 1
    %59 = vperm.xlu0 %58, %v38
    %v60 = vpop.permute.xlu0 %59
    %v62 = vmul.f32 %v60, %v51
    %v63 = vadd.f32 %v62, %v56
    %64 = vset.pattern.permute.xlu0 2
    %65 = vperm.xlu0 %64, %v38
    %v66 = vpop.permute.xlu0 %65
    %v68 = vmul.f32 %v66, %v51
    %v69 = vadd.f32 %v68, %v56
    %70 = vset.pattern.permute.xlu0 3
    %71 = vperm.xlu0 %70, %v38
    %v72 = vpop.permute.xlu0 %71
    %v74 = vmul.f32 %v72, %v51
    %v75 = vadd.f32 %v74, %v56
    %76 = vset.pattern.permute.xlu0 4
    %77 = vperm.xlu0 %76, %v38
    %v78 = vpop.permute.xlu0 %77
    %v80 = vmul.f32 %v78, %v51
    %v81 = vadd.f32 %v80, %v56
    %82 = vset.pattern.permute.xlu0 5
    %83 = vperm.xlu0 %82, %v38
    %v84 = vpop.permute.xlu0 %83
    %v86 = vmul.f32 %v84, %v51
    %v87 = vadd.f32 %v86, %v56
    %88 = vset.pattern.permute.xlu0 6
    %89 = vperm.xlu0 %88, %v38
    %v90 = vpop.permute.xlu0 %89
    %v92 = vmul.f32 %v90, %v51
    %v93 = vadd.f32 %v92, %v56
    %94 = vset.pattern.permute.xlu0 7
    %95 = vperm.xlu0 %94, %v38
    %v96 = vpop.permute.xlu0 %95
    %v98 = vmul.f32 %v96, %v51
    %v99 = vadd.f32 %v98, %v56
    %100 = vset.pattern.permute.xlu0 8
    %101 = vperm.xlu0 %100, %v38
    %v102 = vpop.permute.xlu0 %101
    %v104 = vmul.f32 %v102, %v51
    %v105 = vadd.f32 %v104, %v56
    %106 = vset.pattern.permute.xlu0 9
    %107 = vperm.xlu0 %106, %v38
    %v108 = vpop.permute.xlu0 %107
    %v110 = vmul.f32 %v108, %v51
    %v111 = vadd.f32 %v110, %v56
    %v112 = vld [vmem:[%s1] sm:$0x3]
    %vm113 = vcmask 261120
    %v115 = vsel %vm113, %v112, 0
    %117 = vmatprep.subr.mxu0 0.0
    %118 = vmatpush1.msra.mxu0 %v39
    %119 = vmatprep.subr.mxu0 0.0
    %120 = vmatpush1.msra.mxu0 %v40
    %121 = vmatprep.subr.mxu0 0.0
    %122 = vmatpush1.msra.mxu0 %v41
    %123 = vmatprep.subr.mxu0 0.0
    %124 = vmatpush1.msra.mxu0 %v42
    %125 = vmatprep.subr.mxu0 0.0
    %126 = vmatpush1.msra.mxu0 0.0
    %127 = vmatprep.subr.mxu0 0.0
    %128 = vmatpush1.msra.mxu0 0.0
    %129 = vmatprep.subr.mxu0 0.0
    %130 = vmatpush1.msra.mxu0 0.0
    %131 = vmatprep.subr.mxu0 0.0
    %132 = vmatpush1.msra.mxu0 0.0
    %133 = vmatprep.subr.mxu0 0.0
    %134 = vmatpush1.msra.mxu0 0.0
    %135 = vmatprep.subr.mxu0 0.0
    %136 = vmatpush1.msra.mxu0 0.0
    %137 = vmatprep.subr.mxu0 0.0
    %138 = vmatpush1.msra.mxu0 0.0
    %139 = vmatprep.subr.mxu0 0.0
    %140 = vmatpush1.msra.mxu0 0.0
    %141 = vmatprep.subr.mxu0 0.0
    %142 = vmatpush1.msra.mxu0 0.0
    %143 = vmatprep.subr.mxu0 0.0
    %144 = vmatpush1.msra.mxu0 0.0
    %145 = vmatprep.subr.mxu0 0.0
    %146 = vmatpush1.msra.mxu0 0.0
    %147 = vmatprep.subr.mxu0 0.0
    %148 = vmatpush1.msra.mxu0 0.0
    %149 = vmatprep.subr.mxu0 0.0
    %150 = vmatpush1.msra.mxu0 0.0
    %151 = vmatprep.subr.mxu0 0.0
    %152 = vmatpush1.msra.mxu0 0.0
    %153 = vmatprep.subr.mxu0 0.0
    %154 = vmatpush1.msra.mxu0 0.0
    %155 = vmatprep.subr.mxu0 0.0
    %156 = vmatpush1.msra.mxu0 0.0
    %157 = vmatprep.subr.mxu0 0.0
    %158 = vmatpush1.msra.mxu0 0.0
    %159 = vmatprep.subr.mxu0 0.0
    %160 = vmatpush1.msra.mxu0 0.0
    %161 = vmatprep.subr.mxu0 0.0
    %162 = vmatpush1.msra.mxu0 0.0
    %163 = vmatprep.subr.mxu0 0.0
    %164 = vmatpush1.msra.mxu0 0.0
    %165 = vmatprep.subr.mxu0 0.0
    %166 = vmatpush1.msra.mxu0 0.0
    %167 = vmatprep.subr.mxu0 0.0
    %168 = vmatpush1.msra.mxu0 0.0
    %169 = vmatprep.subr.mxu0 0.0
    %170 = vmatpush1.msra.mxu0 0.0
    %171 = vmatprep.subr.mxu0 0.0
    %172 = vmatpush1.msra.mxu0 0.0
    %173 = vmatprep.subr.mxu0 0.0
    %174 = vmatpush1.msra.mxu0 0.0
    %175 = vmatprep.subr.mxu0 0.0
    %176 = vmatpush1.msra.mxu0 0.0
    %177 = vmatprep.subr.mxu0 0.0
    %178 = vmatpush1.msra.mxu0 0.0
    %179 = vmatprep.subr.mxu0 0.0
    %180 = vmatpush1.msra.mxu0 0.0
    %181 = vmatprep.mubr.f32.mxu0 0.0
    %182 = vmatmul.mubr.f32.gmra.mrb[0].mxu0 %v115
    %v183 = vpop.f32.mrb[0].mxu0
    %v184 = vadd.f32 0.0, %v183
    %v185 = vpop.f32.mrb[0].mxu0
    %186 = vdwg.mxu0
    %v187 = vadd.f32 %v57, %v184
    %v188 = vtanh.pop %v187
    %v189 = vlaneseq
    %v190 = vshrl.u32 %v189, 7
    %v191 = vsub.s32 0, %v190
    %v192 = vrot.slane %v36, %v191
    %v193 = vmul.f32 %v188, %v192
    %vm194 = vcmask 254976
    %v195 = vsel %vm194, %v193, 0.0
    %196 = vadd.xlane.f32.xlu0 %v195
    %v197 = vpop.xlane.xlu0 %196
    %v199 = vsel %vm113, %v188, 0
    %201 = vmatprep.subr.mxu0 0.0
    %202 = vmatpush1.msra.mxu0 %v39
    %203 = vmatprep.subr.mxu0 0.0
    %204 = vmatpush1.msra.mxu0 %v40
    %205 = vmatprep.subr.mxu0 0.0
    %206 = vmatpush1.msra.mxu0 %v41
    %207 = vmatprep.subr.mxu0 0.0
    %208 = vmatpush1.msra.mxu0 %v42
    %209 = vmatprep.subr.mxu0 0.0
    %210 = vmatpush1.msra.mxu0 0.0
    %211 = vmatprep.subr.mxu0 0.0
    %212 = vmatpush1.msra.mxu0 0.0
    %213 = vmatprep.subr.mxu0 0.0
    %214 = vmatpush1.msra.mxu0 0.0
    %215 = vmatprep.subr.mxu0 0.0
    %216 = vmatpush1.msra.mxu0 0.0
    %217 = vmatprep.subr.mxu0 0.0
    %218 = vmatpush1.msra.mxu0 0.0
    %219 = vmatprep.subr.mxu0 0.0
    %220 = vmatpush1.msra.mxu0 0.0
    %221 = vmatprep.subr.mxu0 0.0
    %222 = vmatpush1.msra.mxu0 0.0
    %223 = vmatprep.subr.mxu0 0.0
    %224 = vmatpush1.msra.mxu0 0.0
    %225 = vmatprep.subr.mxu0 0.0
    %226 = vmatpush1.msra.mxu0 0.0
    %227 = vmatprep.subr.mxu0 0.0
    %228 = vmatpush1.msra.mxu0 0.0
    %229 = vmatprep.subr.mxu0 0.0
    %230 = vmatpush1.msra.mxu0 0.0
    %231 = vmatprep.subr.mxu0 0.0
    %232 = vmatpush1.msra.mxu0 0.0
    %233 = vmatprep.subr.mxu0 0.0
    %234 = vmatpush1.msra.mxu0 0.0
    %235 = vmatprep.subr.mxu0 0.0
    %236 = vmatpush1.msra.mxu0 0.0
    %237 = vmatprep.subr.mxu0 0.0
    %238 = vmatpush1.msra.mxu0 0.0
    %239 = vmatprep.subr.mxu0 0.0
    %240 = vmatpush1.msra.mxu0 0.0
    %241 = vmatprep.subr.mxu0 0.0
    %242 = vmatpush1.msra.mxu0 0.0
    %243 = vmatprep.subr.mxu0 0.0
    %244 = vmatpush1.msra.mxu0 0.0
    %245 = vmatprep.subr.mxu0 0.0
    %246 = vmatpush1.msra.mxu0 0.0
    %247 = vmatprep.subr.mxu0 0.0
    %248 = vmatpush1.msra.mxu0 0.0
    %249 = vmatprep.subr.mxu0 0.0
    %250 = vmatpush1.msra.mxu0 0.0
    %251 = vmatprep.subr.mxu0 0.0
    %252 = vmatpush1.msra.mxu0 0.0
    %253 = vmatprep.subr.mxu0 0.0
    %254 = vmatpush1.msra.mxu0 0.0
    %255 = vmatprep.subr.mxu0 0.0
    %256 = vmatpush1.msra.mxu0 0.0
    %257 = vmatprep.subr.mxu0 0.0
    %258 = vmatpush1.msra.mxu0 0.0
    %259 = vmatprep.subr.mxu0 0.0
    %260 = vmatpush1.msra.mxu0 0.0
    %261 = vmatprep.subr.mxu0 0.0
    %262 = vmatpush1.msra.mxu0 0.0
    %263 = vmatprep.subr.mxu0 0.0
    %264 = vmatpush1.msra.mxu0 0.0
    %265 = vmatprep.mubr.f32.mxu0 0.0
    %266 = vmatmul.mubr.f32.gmra.mrb[0].mxu0 %v199
    %v267 = vpop.f32.mrb[0].mxu0
    %v268 = vadd.f32 0.0, %v267
    %v269 = vpop.f32.mrb[0].mxu0
    %270 = vdwg.mxu0
    %v271 = vadd.f32 %v63, %v268
    %v272 = vtanh.pop %v271
    %v273 = vmul.f32 %v272, %v192
    %v274 = vsel %vm194, %v273, 0.0
    %275 = vadd.xlane.f32.xlu0 %v274
    %v276 = vpop.xlane.xlu0 %275
    %v278 = vsel %vm113, %v272, 0
    %280 = vmatprep.subr.mxu0 0.0
    %281 = vmatpush1.msra.mxu0 %v39
    %282 = vmatprep.subr.mxu0 0.0
    %283 = vmatpush1.msra.mxu0 %v40
    %284 = vmatprep.subr.mxu0 0.0
    %285 = vmatpush1.msra.mxu0 %v41
    %286 = vmatprep.subr.mxu0 0.0
    %287 = vmatpush1.msra.mxu0 %v42
    %288 = vmatprep.subr.mxu0 0.0
    %289 = vmatpush1.msra.mxu0 0.0
    %290 = vmatprep.subr.mxu0 0.0
    %291 = vmatpush1.msra.mxu0 0.0
    %292 = vmatprep.subr.mxu0 0.0
    %293 = vmatpush1.msra.mxu0 0.0
    %294 = vmatprep.subr.mxu0 0.0
    %295 = vmatpush1.msra.mxu0 0.0
    %296 = vmatprep.subr.mxu0 0.0
    %297 = vmatpush1.msra.mxu0 0.0
    %298 = vmatprep.subr.mxu0 0.0
    %299 = vmatpush1.msra.mxu0 0.0
    %300 = vmatprep.subr.mxu0 0.0
    %301 = vmatpush1.msra.mxu0 0.0
    %302 = vmatprep.subr.mxu0 0.0
    %303 = vmatpush1.msra.mxu0 0.0
    %304 = vmatprep.subr.mxu0 0.0
    %305 = vmatpush1.msra.mxu0 0.0
    %306 = vmatprep.subr.mxu0 0.0
    %307 = vmatpush1.msra.mxu0 0.0
    %308 = vmatprep.subr.mxu0 0.0
    %309 = vmatpush1.msra.mxu0 0.0
    %310 = vmatprep.subr.mxu0 0.0
    %311 = vmatpush1.msra.mxu0 0.0
    %312 = vmatprep.subr.mxu0 0.0
    %313 = vmatpush1.msra.mxu0 0.0
    %314 = vmatprep.subr.mxu0 0.0
    %315 = vmatpush1.msra.mxu0 0.0
    %316 = vmatprep.subr.mxu0 0.0
    %317 = vmatpush1.msra.mxu0 0.0
    %318 = vmatprep.subr.mxu0 0.0
    %319 = vmatpush1.msra.mxu0 0.0
    %320 = vmatprep.subr.mxu0 0.0
    %321 = vmatpush1.msra.mxu0 0.0
    %322 = vmatprep.subr.mxu0 0.0
    %323 = vmatpush1.msra.mxu0 0.0
    %324 = vmatprep.subr.mxu0 0.0
    %325 = vmatpush1.msra.mxu0 0.0
    %326 = vmatprep.subr.mxu0 0.0
    %327 = vmatpush1.msra.mxu0 0.0
    %328 = vmatprep.subr.mxu0 0.0
    %329 = vmatpush1.msra.mxu0 0.0
    %330 = vmatprep.subr.mxu0 0.0
    %331 = vmatpush1.msra.mxu0 0.0
    %332 = vmatprep.subr.mxu0 0.0
    %333 = vmatpush1.msra.mxu0 0.0
    %334 = vmatprep.subr.mxu0 0.0
    %335 = vmatpush1.msra.mxu0 0.0
    %336 = vmatprep.subr.mxu0 0.0
    %337 = vmatpush1.msra.mxu0 0.0
    %338 = vmatprep.subr.mxu0 0.0
    %339 = vmatpush1.msra.mxu0 0.0
    %340 = vmatprep.subr.mxu0 0.0
    %341 = vmatpush1.msra.mxu0 0.0
    %342 = vmatprep.subr.mxu0 0.0
    %343 = vmatpush1.msra.mxu0 0.0
    %344 = vmatprep.mubr.f32.mxu0 0.0
    %345 = vmatmul.mubr.f32.gmra.mrb[0].mxu0 %v278
    %v346 = vpop.f32.mrb[0].mxu0
    %v347 = vadd.f32 0.0, %v346
    %v348 = vpop.f32.mrb[0].mxu0
    %349 = vdwg.mxu0
    %v350 = vadd.f32 %v69, %v347
    %v351 = vtanh.pop %v350
    %v352 = vmul.f32 %v351, %v192
    %v353 = vsel %vm194, %v352, 0.0
    %354 = vadd.xlane.f32.xlu0 %v353
    %v355 = vpop.xlane.xlu0 %354
    %v357 = vsel %vm113, %v351, 0
    %359 = vmatprep.subr.mxu0 0.0
    %360 = vmatpush1.msra.mxu0 %v39
    %361 = vmatprep.subr.mxu0 0.0
    %362 = vmatpush1.msra.mxu0 %v40
    %363 = vmatprep.subr.mxu0 0.0
    %364 = vmatpush1.msra.mxu0 %v41
    %365 = vmatprep.subr.mxu0 0.0
    %366 = vmatpush1.msra.mxu0 %v42
    %367 = vmatprep.subr.mxu0 0.0
    %368 = vmatpush1.msra.mxu0 0.0
    %369 = vmatprep.subr.mxu0 0.0
    %370 = vmatpush1.msra.mxu0 0.0
    %371 = vmatprep.subr.mxu0 0.0
    %372 = vmatpush1.msra.mxu0 0.0
    %373 = vmatprep.subr.mxu0 0.0
    %374 = vmatpush1.msra.mxu0 0.0
    %375 = vmatprep.subr.mxu0 0.0
    %376 = vmatpush1.msra.mxu0 0.0
    %377 = vmatprep.subr.mxu0 0.0
    %378 = vmatpush1.msra.mxu0 0.0
    %379 = vmatprep.subr.mxu0 0.0
    %380 = vmatpush1.msra.mxu0 0.0
    %381 = vmatprep.subr.mxu0 0.0
    %382 = vmatpush1.msra.mxu0 0.0
    %383 = vmatprep.subr.mxu0 0.0
    %384 = vmatpush1.msra.mxu0 0.0
    %385 = vmatprep.subr.mxu0 0.0
    %386 = vmatpush1.msra.mxu0 0.0
    %387 = vmatprep.subr.mxu0 0.0
    %388 = vmatpush1.msra.mxu0 0.0
    %389 = vmatprep.subr.mxu0 0.0
    %390 = vmatpush1.msra.mxu0 0.0
    %391 = vmatprep.subr.mxu0 0.0
    %392 = vmatpush1.msra.mxu0 0.0
    %393 = vmatprep.subr.mxu0 0.0
    %394 = vmatpush1.msra.mxu0 0.0
    %395 = vmatprep.subr.mxu0 0.0
    %396 = vmatpush1.msra.mxu0 0.0
    %397 = vmatprep.subr.mxu0 0.0
    %398 = vmatpush1.msra.mxu0 0.0
    %399 = vmatprep.subr.mxu0 0.0
    %400 = vmatpush1.msra.mxu0 0.0
    %401 = vmatprep.subr.mxu0 0.0
    %402 = vmatpush1.msra.mxu0 0.0
    %403 = vmatprep.subr.mxu0 0.0
    %404 = vmatpush1.msra.mxu0 0.0
    %405 = vmatprep.subr.mxu0 0.0
    %406 = vmatpush1.msra.mxu0 0.0
    %407 = vmatprep.subr.mxu0 0.0
    %408 = vmatpush1.msra.mxu0 0.0
    %409 = vmatprep.subr.mxu0 0.0
    %410 = vmatpush1.msra.mxu0 0.0
    %411 = vmatprep.subr.mxu0 0.0
    %412 = vmatpush1.msra.mxu0 0.0
    %413 = vmatprep.subr.mxu0 0.0
    %414 = vmatpush1.msra.mxu0 0.0
    %415 = vmatprep.subr.mxu0 0.0
    %416 = vmatpush1.msra.mxu0 0.0
    %417 = vmatprep.subr.mxu0 0.0
    %418 = vmatpush1.msra.mxu0 0.0
    %419 = vmatprep.subr.mxu0 0.0
    %420 = vmatpush1.msra.mxu0 0.0
    %421 = vmatprep.subr.mxu0 0.0
    %422 = vmatpush1.msra.mxu0 0.0
    %423 = vmatprep.mubr.f32.mxu0 0.0
    %424 = vmatmul.mubr.f32.gmra.mrb[0].mxu0 %v357
    %v425 = vpop.f32.mrb[0].mxu0
    %v426 = vadd.f32 0.0, %v425
    %v427 = vpop.f32.mrb[0].mxu0
    %428 = vdwg.mxu0
    %v429 = vadd.f32 %v75, %v426
    %v430 = vtanh.pop %v429
    %v431 = vmul.f32 %v430, %v192
    %v432 = vsel %vm194, %v431, 0.0
    %433 = vadd.xlane.f32.xlu0 %v432
    %v434 = vpop.xlane.xlu0 %433
    %v436 = vsel %vm113, %v430, 0
    %438 = vmatprep.subr.mxu0 0.0
    %439 = vmatpush1.msra.mxu0 %v39
    %440 = vmatprep.subr.mxu0 0.0
    %441 = vmatpush1.msra.mxu0 %v40
    %442 = vmatprep.subr.mxu0 0.0
    %443 = vmatpush1.msra.mxu0 %v41
    %444 = vmatprep.subr.mxu0 0.0
    %445 = vmatpush1.msra.mxu0 %v42
    %446 = vmatprep.subr.mxu0 0.0
    %447 = vmatpush1.msra.mxu0 0.0
    %448 = vmatprep.subr.mxu0 0.0
    %449 = vmatpush1.msra.mxu0 0.0
    %450 = vmatprep.subr.mxu0 0.0
    %451 = vmatpush1.msra.mxu0 0.0
    %452 = vmatprep.subr.mxu0 0.0
    %453 = vmatpush1.msra.mxu0 0.0
    %454 = vmatprep.subr.mxu0 0.0
    %455 = vmatpush1.msra.mxu0 0.0
    %456 = vmatprep.subr.mxu0 0.0
    %457 = vmatpush1.msra.mxu0 0.0
    %458 = vmatprep.subr.mxu0 0.0
    %459 = vmatpush1.msra.mxu0 0.0
    %460 = vmatprep.subr.mxu0 0.0
    %461 = vmatpush1.msra.mxu0 0.0
    %462 = vmatprep.subr.mxu0 0.0
    %463 = vmatpush1.msra.mxu0 0.0
    %464 = vmatprep.subr.mxu0 0.0
    %465 = vmatpush1.msra.mxu0 0.0
    %466 = vmatprep.subr.mxu0 0.0
    %467 = vmatpush1.msra.mxu0 0.0
    %468 = vmatprep.subr.mxu0 0.0
    %469 = vmatpush1.msra.mxu0 0.0
    %470 = vmatprep.subr.mxu0 0.0
    %471 = vmatpush1.msra.mxu0 0.0
    %472 = vmatprep.subr.mxu0 0.0
    %473 = vmatpush1.msra.mxu0 0.0
    %474 = vmatprep.subr.mxu0 0.0
    %475 = vmatpush1.msra.mxu0 0.0
    %476 = vmatprep.subr.mxu0 0.0
    %477 = vmatpush1.msra.mxu0 0.0
    %478 = vmatprep.subr.mxu0 0.0
    %479 = vmatpush1.msra.mxu0 0.0
    %480 = vmatprep.subr.mxu0 0.0
    %481 = vmatpush1.msra.mxu0 0.0
    %482 = vmatprep.subr.mxu0 0.0
    %483 = vmatpush1.msra.mxu0 0.0
    %484 = vmatprep.subr.mxu0 0.0
    %485 = vmatpush1.msra.mxu0 0.0
    %486 = vmatprep.subr.mxu0 0.0
    %487 = vmatpush1.msra.mxu0 0.0
    %488 = vmatprep.subr.mxu0 0.0
    %489 = vmatpush1.msra.mxu0 0.0
    %490 = vmatprep.subr.mxu0 0.0
    %491 = vmatpush1.msra.mxu0 0.0
    %492 = vmatprep.subr.mxu0 0.0
    %493 = vmatpush1.msra.mxu0 0.0
    %494 = vmatprep.subr.mxu0 0.0
    %495 = vmatpush1.msra.mxu0 0.0
    %496 = vmatprep.subr.mxu0 0.0
    %497 = vmatpush1.msra.mxu0 0.0
    %498 = vmatprep.subr.mxu0 0.0
    %499 = vmatpush1.msra.mxu0 0.0
    %500 = vmatprep.subr.mxu0 0.0
    %501 = vmatpush1.msra.mxu0 0.0
    %502 = vmatprep.mubr.f32.mxu0 0.0
    %503 = vmatmul.mubr.f32.gmra.mrb[0].mxu0 %v436
    %v504 = vpop.f32.mrb[0].mxu0
    %v505 = vadd.f32 0.0, %v504
    %v506 = vpop.f32.mrb[0].mxu0
    %507 = vdwg.mxu0
    %v508 = vadd.f32 %v81, %v505
    %v509 = vtanh.pop %v508
    %v510 = vmul.f32 %v509, %v192
    %v511 = vsel %vm194, %v510, 0.0
    %512 = vadd.xlane.f32.xlu0 %v511
    %v513 = vpop.xlane.xlu0 %512
    %v515 = vsel %vm113, %v509, 0
    %517 = vmatprep.subr.mxu0 0.0
    %518 = vmatpush1.msra.mxu0 %v39
    %519 = vmatprep.subr.mxu0 0.0
    %520 = vmatpush1.msra.mxu0 %v40
    %521 = vmatprep.subr.mxu0 0.0
    %522 = vmatpush1.msra.mxu0 %v41
    %523 = vmatprep.subr.mxu0 0.0
    %524 = vmatpush1.msra.mxu0 %v42
    %525 = vmatprep.subr.mxu0 0.0
    %526 = vmatpush1.msra.mxu0 0.0
    %527 = vmatprep.subr.mxu0 0.0
    %528 = vmatpush1.msra.mxu0 0.0
    %529 = vmatprep.subr.mxu0 0.0
    %530 = vmatpush1.msra.mxu0 0.0
    %531 = vmatprep.subr.mxu0 0.0
    %532 = vmatpush1.msra.mxu0 0.0
    %533 = vmatprep.subr.mxu0 0.0
    %534 = vmatpush1.msra.mxu0 0.0
    %535 = vmatprep.subr.mxu0 0.0
    %536 = vmatpush1.msra.mxu0 0.0
    %537 = vmatprep.subr.mxu0 0.0
    %538 = vmatpush1.msra.mxu0 0.0
    %539 = vmatprep.subr.mxu0 0.0
    %540 = vmatpush1.msra.mxu0 0.0
    %541 = vmatprep.subr.mxu0 0.0
    %542 = vmatpush1.msra.mxu0 0.0
    %543 = vmatprep.subr.mxu0 0.0
    %544 = vmatpush1.msra.mxu0 0.0
    %545 = vmatprep.subr.mxu0 0.0
    %546 = vmatpush1.msra.mxu0 0.0
    %547 = vmatprep.subr.mxu0 0.0
    %548 = vmatpush1.msra.mxu0 0.0
    %549 = vmatprep.subr.mxu0 0.0
    %550 = vmatpush1.msra.mxu0 0.0
    %551 = vmatprep.subr.mxu0 0.0
    %552 = vmatpush1.msra.mxu0 0.0
    %553 = vmatprep.subr.mxu0 0.0
    %554 = vmatpush1.msra.mxu0 0.0
    %555 = vmatprep.subr.mxu0 0.0
    %556 = vmatpush1.msra.mxu0 0.0
    %557 = vmatprep.subr.mxu0 0.0
    %558 = vmatpush1.msra.mxu0 0.0
    %559 = vmatprep.subr.mxu0 0.0
    %560 = vmatpush1.msra.mxu0 0.0
    %561 = vmatprep.subr.mxu0 0.0
    %562 = vmatpush1.msra.mxu0 0.0
    %563 = vmatprep.subr.mxu0 0.0
    %564 = vmatpush1.msra.mxu0 0.0
    %565 = vmatprep.subr.mxu0 0.0
    %566 = vmatpush1.msra.mxu0 0.0
    %567 = vmatprep.subr.mxu0 0.0
    %568 = vmatpush1.msra.mxu0 0.0
    %569 = vmatprep.subr.mxu0 0.0
    %570 = vmatpush1.msra.mxu0 0.0
    %571 = vmatprep.subr.mxu0 0.0
    %572 = vmatpush1.msra.mxu0 0.0
    %573 = vmatprep.subr.mxu0 0.0
    %574 = vmatpush1.msra.mxu0 0.0
    %575 = vmatprep.subr.mxu0 0.0
    %576 = vmatpush1.msra.mxu0 0.0
    %577 = vmatprep.subr.mxu0 0.0
    %578 = vmatpush1.msra.mxu0 0.0
    %579 = vmatprep.subr.mxu0 0.0
    %580 = vmatpush1.msra.mxu0 0.0
    %581 = vmatprep.mubr.f32.mxu0 0.0
    %582 = vmatmul.mubr.f32.gmra.mrb[0].mxu0 %v515
    %v583 = vpop.f32.mrb[0].mxu0
    %v584 = vadd.f32 0.0, %v583
    %v585 = vpop.f32.mrb[0].mxu0
    %586 = vdwg.mxu0
    %v587 = vadd.f32 %v87, %v584
    %v588 = vtanh.pop %v587
    %v589 = vmul.f32 %v588, %v192
    %v590 = vsel %vm194, %v589, 0.0
    %591 = vadd.xlane.f32.xlu0 %v590
    %v592 = vpop.xlane.xlu0 %591
    %v594 = vsel %vm113, %v588, 0
    %596 = vmatprep.subr.mxu0 0.0
    %597 = vmatpush1.msra.mxu0 %v39
    %598 = vmatprep.subr.mxu0 0.0
    %599 = vmatpush1.msra.mxu0 %v40
    %600 = vmatprep.subr.mxu0 0.0
    %601 = vmatpush1.msra.mxu0 %v41
    %602 = vmatprep.subr.mxu0 0.0
    %603 = vmatpush1.msra.mxu0 %v42
    %604 = vmatprep.subr.mxu0 0.0
    %605 = vmatpush1.msra.mxu0 0.0
    %606 = vmatprep.subr.mxu0 0.0
    %607 = vmatpush1.msra.mxu0 0.0
    %608 = vmatprep.subr.mxu0 0.0
    %609 = vmatpush1.msra.mxu0 0.0
    %610 = vmatprep.subr.mxu0 0.0
    %611 = vmatpush1.msra.mxu0 0.0
    %612 = vmatprep.subr.mxu0 0.0
    %613 = vmatpush1.msra.mxu0 0.0
    %614 = vmatprep.subr.mxu0 0.0
    %615 = vmatpush1.msra.mxu0 0.0
    %616 = vmatprep.subr.mxu0 0.0
    %617 = vmatpush1.msra.mxu0 0.0
    %618 = vmatprep.subr.mxu0 0.0
    %619 = vmatpush1.msra.mxu0 0.0
    %620 = vmatprep.subr.mxu0 0.0
    %621 = vmatpush1.msra.mxu0 0.0
    %622 = vmatprep.subr.mxu0 0.0
    %623 = vmatpush1.msra.mxu0 0.0
    %624 = vmatprep.subr.mxu0 0.0
    %625 = vmatpush1.msra.mxu0 0.0
    %626 = vmatprep.subr.mxu0 0.0
    %627 = vmatpush1.msra.mxu0 0.0
    %628 = vmatprep.subr.mxu0 0.0
    %629 = vmatpush1.msra.mxu0 0.0
    %630 = vmatprep.subr.mxu0 0.0
    %631 = vmatpush1.msra.mxu0 0.0
    %632 = vmatprep.subr.mxu0 0.0
    %633 = vmatpush1.msra.mxu0 0.0
    %634 = vmatprep.subr.mxu0 0.0
    %635 = vmatpush1.msra.mxu0 0.0
    %636 = vmatprep.subr.mxu0 0.0
    %637 = vmatpush1.msra.mxu0 0.0
    %638 = vmatprep.subr.mxu0 0.0
    %639 = vmatpush1.msra.mxu0 0.0
    %640 = vmatprep.subr.mxu0 0.0
    %641 = vmatpush1.msra.mxu0 0.0
    %642 = vmatprep.subr.mxu0 0.0
    %643 = vmatpush1.msra.mxu0 0.0
    %644 = vmatprep.subr.mxu0 0.0
    %645 = vmatpush1.msra.mxu0 0.0
    %646 = vmatprep.subr.mxu0 0.0
    %647 = vmatpush1.msra.mxu0 0.0
    %648 = vmatprep.subr.mxu0 0.0
    %649 = vmatpush1.msra.mxu0 0.0
    %650 = vmatprep.subr.mxu0 0.0
    %651 = vmatpush1.msra.mxu0 0.0
    %652 = vmatprep.subr.mxu0 0.0
    %653 = vmatpush1.msra.mxu0 0.0
    %654 = vmatprep.subr.mxu0 0.0
    %655 = vmatpush1.msra.mxu0 0.0
    %656 = vmatprep.subr.mxu0 0.0
    %657 = vmatpush1.msra.mxu0 0.0
    %658 = vmatprep.subr.mxu0 0.0
    %659 = vmatpush1.msra.mxu0 0.0
    %660 = vmatprep.mubr.f32.mxu0 0.0
    %661 = vmatmul.mubr.f32.gmra.mrb[0].mxu0 %v594
    %v662 = vpop.f32.mrb[0].mxu0
    %v663 = vadd.f32 0.0, %v662
    %v664 = vpop.f32.mrb[0].mxu0
    %665 = vdwg.mxu0
    %v666 = vadd.f32 %v93, %v663
    %v667 = vtanh.pop %v666
    %v668 = vmul.f32 %v667, %v192
    %v669 = vsel %vm194, %v668, 0.0
    %670 = vadd.xlane.f32.xlu0 %v669
    %v671 = vpop.xlane.xlu0 %670
    %v673 = vsel %vm113, %v667, 0
    %675 = vmatprep.subr.mxu0 0.0
    %676 = vmatpush1.msra.mxu0 %v39
    %677 = vmatprep.subr.mxu0 0.0
    %678 = vmatpush1.msra.mxu0 %v40
    %679 = vmatprep.subr.mxu0 0.0
    %680 = vmatpush1.msra.mxu0 %v41
    %681 = vmatprep.subr.mxu0 0.0
    %682 = vmatpush1.msra.mxu0 %v42
    %683 = vmatprep.subr.mxu0 0.0
    %684 = vmatpush1.msra.mxu0 0.0
    %685 = vmatprep.subr.mxu0 0.0
    %686 = vmatpush1.msra.mxu0 0.0
    %687 = vmatprep.subr.mxu0 0.0
    %688 = vmatpush1.msra.mxu0 0.0
    %689 = vmatprep.subr.mxu0 0.0
    %690 = vmatpush1.msra.mxu0 0.0
    %691 = vmatprep.subr.mxu0 0.0
    %692 = vmatpush1.msra.mxu0 0.0
    %693 = vmatprep.subr.mxu0 0.0
    %694 = vmatpush1.msra.mxu0 0.0
    %695 = vmatprep.subr.mxu0 0.0
    %696 = vmatpush1.msra.mxu0 0.0
    %697 = vmatprep.subr.mxu0 0.0
    %698 = vmatpush1.msra.mxu0 0.0
    %699 = vmatprep.subr.mxu0 0.0
    %700 = vmatpush1.msra.mxu0 0.0
    %701 = vmatprep.subr.mxu0 0.0
    %702 = vmatpush1.msra.mxu0 0.0
    %703 = vmatprep.subr.mxu0 0.0
    %704 = vmatpush1.msra.mxu0 0.0
    %705 = vmatprep.subr.mxu0 0.0
    %706 = vmatpush1.msra.mxu0 0.0
    %707 = vmatprep.subr.mxu0 0.0
    %708 = vmatpush1.msra.mxu0 0.0
    %709 = vmatprep.subr.mxu0 0.0
    %710 = vmatpush1.msra.mxu0 0.0
    %711 = vmatprep.subr.mxu0 0.0
    %712 = vmatpush1.msra.mxu0 0.0
    %713 = vmatprep.subr.mxu0 0.0
    %714 = vmatpush1.msra.mxu0 0.0
    %715 = vmatprep.subr.mxu0 0.0
    %716 = vmatpush1.msra.mxu0 0.0
    %717 = vmatprep.subr.mxu0 0.0
    %718 = vmatpush1.msra.mxu0 0.0
    %719 = vmatprep.subr.mxu0 0.0
    %720 = vmatpush1.msra.mxu0 0.0
    %721 = vmatprep.subr.mxu0 0.0
    %722 = vmatpush1.msra.mxu0 0.0
    %723 = vmatprep.subr.mxu0 0.0
    %724 = vmatpush1.msra.mxu0 0.0
    %725 = vmatprep.subr.mxu0 0.0
    %726 = vmatpush1.msra.mxu0 0.0
    %727 = vmatprep.subr.mxu0 0.0
    %728 = vmatpush1.msra.mxu0 0.0
    %729 = vmatprep.subr.mxu0 0.0
    %730 = vmatpush1.msra.mxu0 0.0
    %731 = vmatprep.subr.mxu0 0.0
    %732 = vmatpush1.msra.mxu0 0.0
    %733 = vmatprep.subr.mxu0 0.0
    %734 = vmatpush1.msra.mxu0 0.0
    %735 = vmatprep.subr.mxu0 0.0
    %736 = vmatpush1.msra.mxu0 0.0
    %737 = vmatprep.subr.mxu0 0.0
    %738 = vmatpush1.msra.mxu0 0.0
    %739 = vmatprep.mubr.f32.mxu0 0.0
    %740 = vmatmul.mubr.f32.gmra.mrb[0].mxu0 %v673
    %v741 = vpop.f32.mrb[0].mxu0
    %v742 = vadd.f32 0.0, %v741
    %v743 = vpop.f32.mrb[0].mxu0
    %744 = vdwg.mxu0
    %v745 = vadd.f32 %v99, %v742
    %v746 = vtanh.pop %v745
    %v747 = vmul.f32 %v746, %v192
    %v748 = vsel %vm194, %v747, 0.0
    %749 = vadd.xlane.f32.xlu0 %v748
    %v750 = vpop.xlane.xlu0 %749
    %v752 = vsel %vm113, %v746, 0
    %754 = vmatprep.subr.mxu0 0.0
    %755 = vmatpush1.msra.mxu0 %v39
    %756 = vmatprep.subr.mxu0 0.0
    %757 = vmatpush1.msra.mxu0 %v40
    %758 = vmatprep.subr.mxu0 0.0
    %759 = vmatpush1.msra.mxu0 %v41
    %760 = vmatprep.subr.mxu0 0.0
    %761 = vmatpush1.msra.mxu0 %v42
    %762 = vmatprep.subr.mxu0 0.0
    %763 = vmatpush1.msra.mxu0 0.0
    %764 = vmatprep.subr.mxu0 0.0
    %765 = vmatpush1.msra.mxu0 0.0
    %766 = vmatprep.subr.mxu0 0.0
    %767 = vmatpush1.msra.mxu0 0.0
    %768 = vmatprep.subr.mxu0 0.0
    %769 = vmatpush1.msra.mxu0 0.0
    %770 = vmatprep.subr.mxu0 0.0
    %771 = vmatpush1.msra.mxu0 0.0
    %772 = vmatprep.subr.mxu0 0.0
    %773 = vmatpush1.msra.mxu0 0.0
    %774 = vmatprep.subr.mxu0 0.0
    %775 = vmatpush1.msra.mxu0 0.0
    %776 = vmatprep.subr.mxu0 0.0
    %777 = vmatpush1.msra.mxu0 0.0
    %778 = vmatprep.subr.mxu0 0.0
    %779 = vmatpush1.msra.mxu0 0.0
    %780 = vmatprep.subr.mxu0 0.0
    %781 = vmatpush1.msra.mxu0 0.0
    %782 = vmatprep.subr.mxu0 0.0
    %783 = vmatpush1.msra.mxu0 0.0
    %784 = vmatprep.subr.mxu0 0.0
    %785 = vmatpush1.msra.mxu0 0.0
    %786 = vmatprep.subr.mxu0 0.0
    %787 = vmatpush1.msra.mxu0 0.0
    %788 = vmatprep.subr.mxu0 0.0
    %789 = vmatpush1.msra.mxu0 0.0
    %790 = vmatprep.subr.mxu0 0.0
    %791 = vmatpush1.msra.mxu0 0.0
    %792 = vmatprep.subr.mxu0 0.0
    %793 = vmatpush1.msra.mxu0 0.0
    %794 = vmatprep.subr.mxu0 0.0
    %795 = vmatpush1.msra.mxu0 0.0
    %796 = vmatprep.subr.mxu0 0.0
    %797 = vmatpush1.msra.mxu0 0.0
    %798 = vmatprep.subr.mxu0 0.0
    %799 = vmatpush1.msra.mxu0 0.0
    %800 = vmatprep.subr.mxu0 0.0
    %801 = vmatpush1.msra.mxu0 0.0
    %802 = vmatprep.subr.mxu0 0.0
    %803 = vmatpush1.msra.mxu0 0.0
    %804 = vmatprep.subr.mxu0 0.0
    %805 = vmatpush1.msra.mxu0 0.0
    %806 = vmatprep.subr.mxu0 0.0
    %807 = vmatpush1.msra.mxu0 0.0
    %808 = vmatprep.subr.mxu0 0.0
    %809 = vmatpush1.msra.mxu0 0.0
    %810 = vmatprep.subr.mxu0 0.0
    %811 = vmatpush1.msra.mxu0 0.0
    %812 = vmatprep.subr.mxu0 0.0
    %813 = vmatpush1.msra.mxu0 0.0
    %814 = vmatprep.subr.mxu0 0.0
    %815 = vmatpush1.msra.mxu0 0.0
    %816 = vmatprep.subr.mxu0 0.0
    %817 = vmatpush1.msra.mxu0 0.0
    %818 = vmatprep.mubr.f32.mxu0 0.0
    %819 = vmatmul.mubr.f32.gmra.mrb[0].mxu0 %v752
    %v820 = vpop.f32.mrb[0].mxu0
    %v821 = vadd.f32 0.0, %v820
    %v822 = vpop.f32.mrb[0].mxu0
    %823 = vdwg.mxu0
    %v824 = vadd.f32 %v105, %v821
    %v825 = vtanh.pop %v824
    %v826 = vmul.f32 %v825, %v192
    %v827 = vsel %vm194, %v826, 0.0
    %828 = vadd.xlane.f32.xlu0 %v827
    %v829 = vpop.xlane.xlu0 %828
    %v831 = vsel %vm113, %v825, 0
    %833 = vmatprep.subr.mxu0 0.0
    %834 = vmatpush1.msra.mxu0 %v39
    %835 = vmatprep.subr.mxu0 0.0
    %836 = vmatpush1.msra.mxu0 %v40
    %837 = vmatprep.subr.mxu0 0.0
    %838 = vmatpush1.msra.mxu0 %v41
    %839 = vmatprep.subr.mxu0 0.0
    %840 = vmatpush1.msra.mxu0 %v42
    %841 = vmatprep.subr.mxu0 0.0
    %842 = vmatpush1.msra.mxu0 0.0
    %843 = vmatprep.subr.mxu0 0.0
    %844 = vmatpush1.msra.mxu0 0.0
    %845 = vmatprep.subr.mxu0 0.0
    %846 = vmatpush1.msra.mxu0 0.0
    %847 = vmatprep.subr.mxu0 0.0
    %848 = vmatpush1.msra.mxu0 0.0
    %849 = vmatprep.subr.mxu0 0.0
    %850 = vmatpush1.msra.mxu0 0.0
    %851 = vmatprep.subr.mxu0 0.0
    %852 = vmatpush1.msra.mxu0 0.0
    %853 = vmatprep.subr.mxu0 0.0
    %854 = vmatpush1.msra.mxu0 0.0
    %855 = vmatprep.subr.mxu0 0.0
    %856 = vmatpush1.msra.mxu0 0.0
    %857 = vmatprep.subr.mxu0 0.0
    %858 = vmatpush1.msra.mxu0 0.0
    %859 = vmatprep.subr.mxu0 0.0
    %860 = vmatpush1.msra.mxu0 0.0
    %861 = vmatprep.subr.mxu0 0.0
    %862 = vmatpush1.msra.mxu0 0.0
    %863 = vmatprep.subr.mxu0 0.0
    %864 = vmatpush1.msra.mxu0 0.0
    %865 = vmatprep.subr.mxu0 0.0
    %866 = vmatpush1.msra.mxu0 0.0
    %867 = vmatprep.subr.mxu0 0.0
    %868 = vmatpush1.msra.mxu0 0.0
    %869 = vmatprep.subr.mxu0 0.0
    %870 = vmatpush1.msra.mxu0 0.0
    %871 = vmatprep.subr.mxu0 0.0
    %872 = vmatpush1.msra.mxu0 0.0
    %873 = vmatprep.subr.mxu0 0.0
    %874 = vmatpush1.msra.mxu0 0.0
    %875 = vmatprep.subr.mxu0 0.0
    %876 = vmatpush1.msra.mxu0 0.0
    %877 = vmatprep.subr.mxu0 0.0
    %878 = vmatpush1.msra.mxu0 0.0
    %879 = vmatprep.subr.mxu0 0.0
    %880 = vmatpush1.msra.mxu0 0.0
    %881 = vmatprep.subr.mxu0 0.0
    %882 = vmatpush1.msra.mxu0 0.0
    %883 = vmatprep.subr.mxu0 0.0
    %884 = vmatpush1.msra.mxu0 0.0
    %885 = vmatprep.subr.mxu0 0.0
    %886 = vmatpush1.msra.mxu0 0.0
    %887 = vmatprep.subr.mxu0 0.0
    %888 = vmatpush1.msra.mxu0 0.0
    %889 = vmatprep.subr.mxu0 0.0
    %890 = vmatpush1.msra.mxu0 0.0
    %891 = vmatprep.subr.mxu0 0.0
    %892 = vmatpush1.msra.mxu0 0.0
    %893 = vmatprep.subr.mxu0 0.0
    %894 = vmatpush1.msra.mxu0 0.0
    %895 = vmatprep.subr.mxu0 0.0
    %896 = vmatpush1.msra.mxu0 0.0
    %897 = vmatprep.mubr.f32.mxu0 0.0
    %898 = vmatmul.mubr.f32.gmra.mrb[0].mxu0 %v831
    %v899 = vpop.f32.mrb[0].mxu0
    %v900 = vadd.f32 0.0, %v899
    %v901 = vpop.f32.mrb[0].mxu0
    %902 = vdwg.mxu0
    %v903 = vadd.f32 %v111, %v900
    %v904 = vtanh.pop %v903
    %v905 = vmul.f32 %v904, %v192
    %v906 = vsel %vm194, %v905, 0.0
    %907 = vadd.xlane.f32.xlu0 %v906
    %v908 = vpop.xlane.xlu0 %907
    %909 = vst.msk [vmem:[%s5] sm:$0x3] %vm194, %v904
    %vm910 = vcmask 7168
    %v911 = vsel %vm910, %v197, %v276
    %vm912 = vcmask 15360
    %v913 = vsel %vm912, %v911, %v355
    %vm914 = vcmask 23552
    %v915 = vsel %vm914, %v913, %v434
    %vm916 = vcmask 31744
    %v917 = vsel %vm916, %v915, %v513
    %vm918 = vcmask 39936
    %v919 = vsel %vm918, %v917, %v592
    %vm920 = vcmask 48128
    %v921 = vsel %vm920, %v919, %v671
    %vm922 = vcmask 56320
    %v923 = vsel %vm922, %v921, %v750
    %vm924 = vcmask 64512
    %v925 = vsel %vm924, %v923, %v829
    %vm926 = vcmask 72704
    %v927 = vsel %vm926, %v925, %v908
    %s929 = vtos %v37
    %v930 = vstv %s929
    %v932 = vadd.f32 %v927, %v930
    %vm933 = vcmask 74752
    %934 = vst.msk [vmem:[#allocation5] sm:$0x3] %vm933, %v932
    // Predicated region
    $region22: #{rnn_forward.1} parent=1 // pred_check
      _
    $region23: #{rnn_forward.1} parent=1 // pred_check_branch
      %936 = sbr.rel (0) target = $region25
    $region24: #{rnn_forward.1} parent=1 // pred_region
      %s938 = ssub.s32 32, 32
      %939 = vsyncadd [#allocation4], %s938
      %s941 = sshll.u32 [#allocation5], 4
      %s942 = int_to_ptr.vmem [resolvable:$true] %s941
      %944 = dma.vmem_to_hbm [thread:$0]  %s942, 32, %s4, [#allocation4]
    $region25: #{rnn_forward.1} parent=1 // pred_fallthru
      _
    // Predicated region
    $region26: #{rnn_forward.1} parent=1 // pred_check
      _
    $region27: #{rnn_forward.1} parent=1 // pred_check_branch
      %946 = sbr.rel (0) target = $region29
    $region28: #{rnn_forward.1} parent=1 // pred_region
      _
    $region29: #{rnn_forward.1} parent=1 // pred_fallthru
      _
    // Predicated region
    $region30: #{rnn_forward.1} parent=1 // pred_check
      _
    $region31: #{rnn_forward.1} parent=1 // pred_check_branch
      %948 = sbr.rel (0) target = $region33
    $region32: #{rnn_forward.1} parent=1 // pred_region
      %949 = dma.done [#allocation4], 32
    $region33: #{rnn_forward.1} parent=1 // pred_fallthru
      _
    // Predicated region
    $region34: #{rnn_forward.1} parent=1 // pred_check
      _
    $region35: #{rnn_forward.1} parent=1 // pred_check_branch
      %951 = sbr.rel (0) target = $region37
    $region36: #{rnn_forward.1} parent=1 // pred_region
      _
    $region37: #{rnn_forward.1} parent=1 // pred_fallthru
      _
    %952 = vsyncpa [#allocation3], 1
    %953 = vsyncpa [#allocation4], 1

</llo_original>
